<compile_context>
chip_gen: v6e
topology: v6e:2x2x1
jax: 0.10.0
libtpu: 0.0.40
codegen_flags: <defaults>
</compile_context>

<pallas_src>
import jax
import jax.numpy as jnp
from jax.experimental import pallas as pl
from jax.experimental.pallas import tpu as pltpu


def _round_up(x, m):
    return ((x + m - 1) // m) * m


def mlp_kernel(x_ref, w1_ref, b1_ref, w2_ref, b2_ref, o_ref):
    # fc1: (tb, nin_p) @ (nin_p, nh_p) on the bf16 MXU path, f32 accumulation.
    x = x_ref[...].astype(w1_ref.dtype)
    h = jnp.dot(x, w1_ref[...], preferred_element_type=jnp.float32)
    h = h + b1_ref[...]
    # LeakyReLU(0.2) in f32 on the VPU.
    h = jnp.where(h >= 0, h, 0.2 * h)
    # fc2: (tb, nh_p) @ (nh_p, nout_p), bf16 MXU + f32 accumulation.
    out = jnp.dot(h.astype(w2_ref.dtype), w2_ref[...],
                  preferred_element_type=jnp.float32)
    out = out + b2_ref[...]
    o_ref[...] = out.astype(o_ref.dtype)


def prepare_mlp_params(w1, g1, b1, w2, g2, b2, *,
                       compute_dtype=jnp.bfloat16, lane_multiple=128):
    """One-time weight preparation (call once, reuse across forwards).

    Folds the weight-norm scale (Frobenius norm over the whole matrix, matching
    LinearWN), pre-transposes to (in, out) so both matmuls feed the MXU
    directly, zero-pads feature dims to lane multiples, and casts the weights
    to the bf16 MXU dtype.  Biases stay f32 for the epilogue.
    """
    nhidden, nin = w1.shape
    nout = w2.shape[0]
    nin_p = _round_up(nin, lane_multiple)
    nh_p = _round_up(nhidden, lane_multiple)
    nout_p = _round_up(nout, lane_multiple)

    # F.linear(x, W * g[:, None] / ||W||_F, b)
    scale1 = g1.reshape(-1) * jax.lax.rsqrt(jnp.sum(w1.astype(jnp.float32) ** 2))
    scale2 = g2.reshape(-1) * jax.lax.rsqrt(jnp.sum(w2.astype(jnp.float32) ** 2))
    w1_eff = (w1 * scale1[:, None]).T            # (nin, nhidden)
    w2_eff = (w2 * scale2[:, None]).T            # (nhidden, nout)

    # Zero padding keeps the math exact: padded hidden pre-activations are
    # 0 -> LeakyReLU(0) = 0 -> contribute 0 to fc2.
    w1_p = jnp.pad(w1_eff, ((0, nin_p - nin), (0, nh_p - nhidden))).astype(compute_dtype)
    w2_p = jnp.pad(w2_eff, ((0, nh_p - nhidden), (0, nout_p - nout))).astype(compute_dtype)
    b1_p = jnp.pad(b1.reshape(1, -1).astype(jnp.float32), ((0, 0), (0, nh_p - nhidden)))
    b2_p = jnp.pad(b2.reshape(1, -1).astype(jnp.float32), ((0, 0), (0, nout_p - nout)))

    return dict(w1_p=w1_p, b1_p=b1_p, w2_p=w2_p, b2_p=b2_p,
                nin=nin, nout=nout, nin_p=nin_p, nh_p=nh_p, nout_p=nout_p)


def mlp_apply(x, params, *, block_b=512):
    """Forward pass using prepared params.  x: (B, nin) float32."""
    B, nin = x.shape
    assert nin == params["nin"]
    nin_p, nh_p, nout_p = params["nin_p"], params["nh_p"], params["nout_p"]
    nout = params["nout"]

    # Batch tiling: cap tile at block_b; on v7x prefer B >= 2*block_b so the
    # "parallel" axis actually shards across both TensorCores.
    tb = min(block_b, _round_up(B, 8))
    b_p = _round_up(B, tb)
    nb = b_p // tb

    # Only pad x when needed (zero-padding keeps padded rows/cols exact; the
    # padded rows are sliced off below).
    if (b_p != B) or (nin_p != nin):
        x_p = jnp.pad(x, ((0, b_p - B), (0, nin_p - nin)))
    else:
        x_p = x

    # Explicit VMEM budget: single-buffered resident weights/biases,
    # double-buffered x/out tiles, f32 hidden intermediate, plus headroom.
    def _nbytes(a):
        return a.size * a.dtype.itemsize
    vmem_bytes = (
        _nbytes(params["w1_p"]) + _nbytes(params["w2_p"])
        + _nbytes(params["b1_p"]) + _nbytes(params["b2_p"])
        + 2 * tb * nin_p * x.dtype.itemsize
        + 2 * tb * nout_p * x.dtype.itemsize
        + tb * nh_p * 4
    )
    vmem_limit = int(max(32 << 20, min(vmem_bytes + (4 << 20), 100 << 20)))

    def _resident_spec(shape):
        # Grid-invariant operand: constant index_map, single-buffered.
        return pl.BlockSpec(shape, lambda i: (0, 0), pipeline_mode=pl.Buffered(1))

    out_p = pl.pallas_call(
        mlp_kernel,
        out_shape=jax.ShapeDtypeStruct((b_p, nout_p), x.dtype),
        grid=(nb,),
        in_specs=[
            pl.BlockSpec((tb, nin_p), lambda i: (i, 0)),        # x: batch-tiled
            _resident_spec((nin_p, nh_p)),                      # w1 (bf16)
            _resident_spec((1, nh_p)),                          # b1 (f32)
            _resident_spec((nh_p, nout_p)),                     # w2 (bf16)
            _resident_spec((1, nout_p)),                        # b2 (f32)
        ],
        out_specs=pl.BlockSpec((tb, nout_p), lambda i: (i, 0)),
        compiler_params=pltpu.CompilerParams(
            dimension_semantics=("parallel",),
            vmem_limit_bytes=vmem_limit,
        ),
    )(x_p, params["w1_p"], params["b1_p"], params["w2_p"], params["b2_p"])

    return out_p[:B, :nout]


def mlp_pallas(x, w1, g1, b1, w2, g2, b2, *, block_b=512):
    """Convenience one-shot wrapper (prep + apply).  For repeated calls with
    static weights, call prepare_mlp_params once and reuse via mlp_apply."""
    params = prepare_mlp_params(w1, g1, b1, w2, g2, b2)
    return mlp_apply(x, params, block_b=block_b)


def mlp_ref(x, w1, g1, b1, w2, g2, b2):
    """Pure-JAX f32 reference mirroring the PyTorch forward."""
    wn1 = jnp.sqrt(jnp.sum(w1 ** 2))
    h = x @ (w1 * g1.reshape(-1, 1) / wn1).T + b1.reshape(-1)
    h = jnp.where(h >= 0, h, 0.2 * h)
    wn2 = jnp.sqrt(jnp.sum(w2 ** 2))
    return h @ (w2 * g2.reshape(-1, 1) / wn2).T + b2.reshape(-1)


if __name__ == "__main__":
    # Small shapes consistent with MLP(nin, nhidden, nout)
    B, nin, nhidden, nout = 8, 16, 32, 8

    key = jax.random.PRNGKey(0)
    kx, kw1, kb1, kw2, kb2 = jax.random.split(key, 5)

    x = jax.random.normal(kx, (B, nin), dtype=jnp.float32)

    # PyTorch Linear shapes: weight (out, in), bias (out,); LinearWN.g init = ones
    w1 = jax.random.normal(kw1, (nhidden, nin), dtype=jnp.float32) * 0.1
    b1 = jax.random.normal(kb1, (nhidden,), dtype=jnp.float32) * 0.1
    g1 = jnp.ones((nhidden,), dtype=jnp.float32)

    w2 = jax.random.normal(kw2, (nout, nhidden), dtype=jnp.float32) * 0.1
    b2 = jax.random.normal(kb2, (nout,), dtype=jnp.float32) * 0.1
    g2 = jnp.ones((nout,), dtype=jnp.float32)

    # One-time weight prep (hoisted out of the per-forward hot path).
    params = prepare_mlp_params(w1, g1, b1, w2, g2, b2)

    out = mlp_apply(x, params)
    out = jax.block_until_ready(out)

    ref = mlp_ref(x, w1, g1, b1, w2, g2, b2)
    assert out.shape == (B, nout)
    # bf16 matmul inputs with f32 accumulation -> loosen tolerance accordingly.
    max_err = float(jnp.max(jnp.abs(out - ref)))
    assert jnp.allclose(out, ref, atol=2e-2, rtol=2e-2), (
        f"mismatch vs reference (max abs err {max_err})")

    print("KERNEL_OK")
</pallas_src>

<mosaic_0001>
module attributes {stable_mosaic.version = 11 : i64} {
  func.func @mlp_kernel(%arg0: i32, %arg1: memref<8x128xf32, #tpu.memory_space<vmem>>, %arg2: memref<128x128xbf16, #tpu.memory_space<vmem>>, %arg3: memref<1x128xf32, #tpu.memory_space<vmem>>, %arg4: memref<128x128xbf16, #tpu.memory_space<vmem>>, %arg5: memref<1x128xf32, #tpu.memory_space<vmem>>, %arg6: memref<8x128xf32, #tpu.memory_space<vmem>>) attributes {dimension_semantics = [#tpu.dimension_semantics<parallel>], iteration_bounds = array<i64: 1>, scalar_prefetch = 0 : i64, scratch_operands = 0 : i64, tpu.core_type = #tpu.core_type<tc>, window_params = [{transform_indices = @transform_0, window_bounds = array<i64: 8, 128>}, {pipeline_mode = #tpu.pipeline_mode<synchronous>, transform_indices = @transform_1, window_bounds = array<i64: 128, 128>}, {pipeline_mode = #tpu.pipeline_mode<synchronous>, transform_indices = @transform_2, window_bounds = array<i64: 1, 128>}, {pipeline_mode = #tpu.pipeline_mode<synchronous>, transform_indices = @transform_3, window_bounds = array<i64: 128, 128>}, {pipeline_mode = #tpu.pipeline_mode<synchronous>, transform_indices = @transform_4, window_bounds = array<i64: 1, 128>}, {transform_indices = @transform_5, window_bounds = array<i64: 8, 128>}]} {
    %c0 = arith.constant 0 : index
    %c0_0 = arith.constant 0 : index
    %0 = vector.load %arg1[%c0, %c0_0] : memref<8x128xf32, #tpu.memory_space<vmem>>, vector<8x128xf32>
    %1 = arith.truncf %0 : vector<8x128xf32> to vector<8x128xbf16>
    %c0_1 = arith.constant 0 : index
    %c0_2 = arith.constant 0 : index
    %2 = vector.load %arg2[%c0_1, %c0_2] : memref<128x128xbf16, #tpu.memory_space<vmem>>, vector<128x128xbf16>
    %cst = arith.constant dense<0.000000e+00> : vector<8x128xf32>
    %3 = tpu.matmul %1, %2, %cst {dimension_numbers = #tpu.dot_dimension_numbers<[1], [0], [0], [1], [0, 0, 1, 1], [], []>} : vector<8x128xbf16>, vector<128x128xbf16>, vector<8x128xf32> -> vector<8x128xf32>
    %c0_3 = arith.constant 0 : index
    %c0_4 = arith.constant 0 : index
    %4 = vector.load %arg3[%c0_3, %c0_4] : memref<1x128xf32, #tpu.memory_space<vmem>>, vector<1x128xf32>
    %5 = vector.broadcast %4 : vector<1x128xf32> to vector<8x128xf32>
    %6 = arith.addf %3, %5 : vector<8x128xf32>
    %cst_5 = arith.constant 0.000000e+00 : f32
    %7 = vector.broadcast %cst_5 : f32 to vector<8x128xf32>
    %8 = arith.cmpf oge, %6, %7 : vector<8x128xf32>
    %cst_6 = arith.constant 2.000000e-01 : f32
    %9 = vector.broadcast %cst_6 : f32 to vector<8x128xf32>
    %10 = arith.mulf %9, %6 : vector<8x128xf32>
    %11 = arith.select %8, %6, %10 : vector<8x128xi1>, vector<8x128xf32>
    %12 = arith.truncf %11 : vector<8x128xf32> to vector<8x128xbf16>
    %c0_7 = arith.constant 0 : index
    %c0_8 = arith.constant 0 : index
    %13 = vector.load %arg4[%c0_7, %c0_8] : memref<128x128xbf16, #tpu.memory_space<vmem>>, vector<128x128xbf16>
    %cst_9 = arith.constant dense<0.000000e+00> : vector<8x128xf32>
    %14 = tpu.matmul %12, %13, %cst_9 {dimension_numbers = #tpu.dot_dimension_numbers<[1], [0], [0], [1], [0, 0, 1, 1], [], []>} : vector<8x128xbf16>, vector<128x128xbf16>, vector<8x128xf32> -> vector<8x128xf32>
    %c0_10 = arith.constant 0 : index
    %c0_11 = arith.constant 0 : index
    %15 = vector.load %arg5[%c0_10, %c0_11] : memref<1x128xf32, #tpu.memory_space<vmem>>, vector<1x128xf32>
    %16 = vector.broadcast %15 : vector<1x128xf32> to vector<8x128xf32>
    %17 = arith.addf %14, %16 : vector<8x128xf32>
    %c0_12 = arith.constant 0 : index
    %c0_13 = arith.constant 0 : index
    %18 = vector.load %arg6[%c0_12, %c0_13] : memref<8x128xf32, #tpu.memory_space<vmem>>, vector<8x128xf32>
    tpu.vector_store %arg6[%c0_12, %c0_13], %17 {strides = array<i32>} : memref<8x128xf32, #tpu.memory_space<vmem>>, vector<8x128xf32>,
    return
  }
  func.func @transform_0(%arg0: i32) -> (i32, i32) {
    %c0_i32 = arith.constant 0 : i32
    %c0_i32_0 = arith.constant 0 : i32
    return %arg0, %c0_i32 : i32, i32
  }
  func.func @transform_1(%arg0: i32) -> (i32, i32) {
    %c0_i32 = arith.constant 0 : i32
    %c0_i32_0 = arith.constant 0 : i32
    %c0_i32_1 = arith.constant 0 : i32
    return %c0_i32, %c0_i32_0 : i32, i32
  }
  func.func @transform_2(%arg0: i32) -> (i32, i32) {
    %c0_i32 = arith.constant 0 : i32
    %c0_i32_0 = arith.constant 0 : i32
    %c0_i32_1 = arith.constant 0 : i32
    return %c0_i32, %c0_i32_0 : i32, i32
  }
  func.func @transform_3(%arg0: i32) -> (i32, i32) {
    %c0_i32 = arith.constant 0 : i32
    %c0_i32_0 = arith.constant 0 : i32
    %c0_i32_1 = arith.constant 0 : i32
    return %c0_i32, %c0_i32_0 : i32, i32
  }
  func.func @transform_4(%arg0: i32) -> (i32, i32) {
    %c0_i32 = arith.constant 0 : i32
    %c0_i32_0 = arith.constant 0 : i32
    %c0_i32_1 = arith.constant 0 : i32
    return %c0_i32, %c0_i32_0 : i32, i32
  }
  func.func @transform_5(%arg0: i32) -> (i32, i32) {
    %c0_i32 = arith.constant 0 : i32
    %c0_i32_0 = arith.constant 0 : i32
    return %arg0, %c0_i32 : i32, i32
  }
}

</mosaic_0001>

<llo_original>
// kernel: tpu_custom_call.1
$region0: #{tpu_custom_call.1}
  #allocation0 [shape = 'u32[]', space=smem, size = 0x4, offset = 0x4, fixed_abs, tag = 'smem constant byte address 0x4 - core index']
  #allocation1 [shape = 'u32[144,128]{1,0:T(1,128)}', space=vmem, size = 0x12000, scoped, tag = 'internal scratch']
  %s0 = inlined_call_operand.hbm [shape: f32[8,128], index: 0, kind: input, shape index: {}]
  %s1 = inlined_call_operand.hbm [shape: bf16[128,128], index: 1, kind: input, shape index: {}]
  %s2 = inlined_call_operand.vmem [shape: f32[1,128], index: 2, kind: input, shape index: {}]
  %s3 = inlined_call_operand.hbm [shape: bf16[128,128], index: 3, kind: input, shape index: {}]
  %s4 = inlined_call_operand.vmem [shape: f32[1,128], index: 4, kind: input, shape index: {}]
  %s5 = inlined_call_operand.hbm [shape: f32[8,128], index: 5, kind: output, shape index: {}]
  %s6 = sld [smem:[#allocation0]]
  $region42: #{tpu_custom_call.1} parent=0
    _
  %s8 = ssub.s32 1, %s6
  %s9 = scalar_select 0, %s8, %s6
  $region1: #{tpu_custom_call.1} parent=0
    #allocation2 [shape = 'u8[4096]{0}', space=vmem, size = 0x1000, scoped, tag = 'input window, operand 0, single buffered']
    #allocation3 [shape = 's32[1]{0}', space=sflag, size = 0x4, scoped, tag = 'scoped memory for tpu_custom_call.1']
    #allocation4 [shape = 's32[1]{0}', space=sflag, size = 0x4, scoped, tag = 'scoped memory for tpu_custom_call.1']
    #allocation5 [shape = 'u8[32768]{0}', space=vmem, size = 0x8000, scoped, tag = 'input window, operand 1, single buffered']
    #allocation6 [shape = 's32[1]{0}', space=sflag, size = 0x4, scoped, tag = 'scoped memory for tpu_custom_call.1']
    #allocation7 [shape = 'u8[32768]{0}', space=vmem, size = 0x8000, scoped, tag = 'input window, operand 3, single buffered']
    #allocation8 [shape = 'u8[4096]{0}', space=vmem, size = 0x1000, scoped, tag = 'output window, operand 0, single buffered']
    %10 = vsyncpa [#allocation3], 0
    %11 = vsyncpa [#allocation6], 0
    %12 = vsyncpa [#allocation4], 0
    // Predicated region
    $region2: #{tpu_custom_call.1} parent=1 // pred_check
      _
    $region3: #{tpu_custom_call.1} parent=1 // pred_check_branch
      %14 = sbr.rel (0) target = $region5
    $region4: #{tpu_custom_call.1} parent=1 // pred_region
      %s16 = ssub.s32 128, 128
      %17 = vsyncadd [#allocation3], %s16
      %s19 = sshll.u32 [#allocation2], 4
      %s20 = int_to_ptr.vmem [resolvable:$true] %s19
      %22 = dma.hbm_to_vmem [thread:$0]  %s0, 128, %s20, [#allocation3]
    $region5: #{tpu_custom_call.1} parent=1 // pred_fallthru
      _
    // Predicated region
    $region6: #{tpu_custom_call.1} parent=1 // pred_check
      _
    $region7: #{tpu_custom_call.1} parent=1 // pred_check_branch
      %24 = sbr.rel (0) target = $region9
    $region8: #{tpu_custom_call.1} parent=1 // pred_region
      %s26 = ssub.s32 1024, 1024
      %27 = vsyncadd [#allocation6], %s26
      %s28 = sshll.u32 [#allocation5], 4
      %s29 = int_to_ptr.vmem [resolvable:$true] %s28
      %34 = dma.hbm_to_vmem [thread:$0]  %s1, 1024, %s29, [#allocation6], 64, 64, 4
    $region9: #{tpu_custom_call.1} parent=1 // pred_fallthru
      _
    // Predicated region
    $region10: #{tpu_custom_call.1} parent=1 // pred_check
      _
    $region11: #{tpu_custom_call.1} parent=1 // pred_check_branch
      %36 = sbr.rel (0) target = $region13
    $region12: #{tpu_custom_call.1} parent=1 // pred_region
      _
    $region13: #{tpu_custom_call.1} parent=1 // pred_fallthru
      _
    // Predicated region
    $region14: #{tpu_custom_call.1} parent=1 // pred_check
      _
    $region15: #{tpu_custom_call.1} parent=1 // pred_check_branch
      %38 = sbr.rel (0) target = $region17
    $region16: #{tpu_custom_call.1} parent=1 // pred_region
      %s40 = ssub.s32 1024, 1024
      %41 = vsyncadd [#allocation6], %s40
      %s42 = sshll.u32 [#allocation7], 4
      %s43 = int_to_ptr.vmem [resolvable:$true] %s42
      %48 = dma.hbm_to_vmem [thread:$0]  %s3, 1024, %s43, [#allocation6], 64, 64, 4
    $region17: #{tpu_custom_call.1} parent=1 // pred_fallthru
      _
    // Predicated region
    $region18: #{tpu_custom_call.1} parent=1 // pred_check
      _
    $region19: #{tpu_custom_call.1} parent=1 // pred_check_branch
      %50 = sbr.rel (0) target = $region21
    $region20: #{tpu_custom_call.1} parent=1 // pred_region
      _
    $region21: #{tpu_custom_call.1} parent=1 // pred_fallthru
      _
    // Predicated region
    $region22: #{tpu_custom_call.1} parent=1 // pred_check
      _
    $region23: #{tpu_custom_call.1} parent=1 // pred_check_branch
      %52 = sbr.rel (0) target = $region25
    $region24: #{tpu_custom_call.1} parent=1 // pred_region
      %53 = dma.done [#allocation3], 128
    $region25: #{tpu_custom_call.1} parent=1 // pred_fallthru
      _
    // Predicated region
    $region26: #{tpu_custom_call.1} parent=1 // pred_check
      _
    $region27: #{tpu_custom_call.1} parent=1 // pred_check_branch
      %55 = sbr.rel (0) target = $region29
    $region28: #{tpu_custom_call.1} parent=1 // pred_region
      %56 = dma.done [#allocation6], 1024
    $region29: #{tpu_custom_call.1} parent=1 // pred_fallthru
      _
    // Predicated region
    $region30: #{tpu_custom_call.1} parent=1 // pred_check
      _
    $region31: #{tpu_custom_call.1} parent=1 // pred_check_branch
      %58 = sbr.rel (0) target = $region33
    $region32: #{tpu_custom_call.1} parent=1 // pred_region
      %59 = dma.done [#allocation6], 1024
    $region33: #{tpu_custom_call.1} parent=1 // pred_fallthru
      _
    %v61 = vld [vmem:[#allocation2] sm:$0xff]
    %v62 = vpack.c.bf16 %v61, %v61
    %v63 = vld [vmem:[#allocation5] sm:$0xf]
    %v64 = vld [vmem:[#allocation5 + $0x4] sm:$0xf]
    %v65 = vld [vmem:[#allocation5 + $0x8] sm:$0xf]
    %v66 = vld [vmem:[#allocation5 + $0xc] sm:$0xf]
    %v67 = vld [vmem:[#allocation5 + $0x10] sm:$0xf]
    %v68 = vld [vmem:[#allocation5 + $0x14] sm:$0xf]
    %v69 = vld [vmem:[#allocation5 + $0x18] sm:$0xf]
    %v70 = vld [vmem:[#allocation5 + $0x1c] sm:$0xf]
    %v71 = vld [vmem:[#allocation5 + $0x20] sm:$0xf]
    %v72 = vld [vmem:[#allocation5 + $0x24] sm:$0xf]
    %v73 = vld [vmem:[#allocation5 + $0x28] sm:$0xf]
    %v74 = vld [vmem:[#allocation5 + $0x2c] sm:$0xf]
    %v75 = vld [vmem:[#allocation5 + $0x30] sm:$0xf]
    %v76 = vld [vmem:[#allocation5 + $0x34] sm:$0xf]
    %v77 = vld [vmem:[#allocation5 + $0x38] sm:$0xf]
    %v78 = vld [vmem:[#allocation5 + $0x3c] sm:$0xf]
    %v79 = vld [vmem:[%s2] sm:$0x1]
    %v81 = vlaneseq
    %v82 = vshrl.u32 %v81, 7
    %v83 = vsub.s32 0, %v82
    %v84 = vrot.slane %v79, %v83
    %v102 = vunpack.c.l.b16 %v63
    %v103 = vunpack.c.l.b16 %v64
    %v104 = vunpack.c.l.b16 %v65
    %v105 = vunpack.c.l.b16 %v66
    %v106 = vunpack.c.l.b16 %v67
    %v107 = vunpack.c.l.b16 %v68
    %v108 = vunpack.c.l.b16 %v69
    %v109 = vunpack.c.l.b16 %v70
    %v110 = vunpack.c.l.b16 %v71
    %v111 = vunpack.c.l.b16 %v72
    %v112 = vunpack.c.l.b16 %v73
    %v113 = vunpack.c.l.b16 %v74
    %v114 = vunpack.c.l.b16 %v75
    %v115 = vunpack.c.l.b16 %v76
    %v116 = vunpack.c.l.b16 %v77
    %v117 = vunpack.c.l.b16 %v78
    %v118 = vpack.c.b16 %v103, %v102
    %v119 = vpack.c.b16 %v105, %v104
    %v120 = vpack.c.b16 %v107, %v106
    %v121 = vpack.c.b16 %v109, %v108
    %v122 = vpack.c.b16 %v111, %v110
    %v123 = vpack.c.b16 %v113, %v112
    %v124 = vpack.c.b16 %v115, %v114
    %v125 = vpack.c.b16 %v117, %v116
    %134 = vmatprep.subr.bf16.mxu0 0
    %135 = vmatpush1.bf16.msra.mxu0 %v125
    %136 = vmatprep.subr.bf16.mxu0 0
    %137 = vmatpush1.bf16.msra.mxu0 %v124
    %138 = vmatprep.subr.bf16.mxu0 0
    %139 = vmatpush1.bf16.msra.mxu0 %v123
    %140 = vmatprep.subr.bf16.mxu0 0
    %141 = vmatpush1.bf16.msra.mxu0 %v122
    %142 = vmatprep.subr.bf16.mxu0 0
    %143 = vmatpush1.bf16.msra.mxu0 %v121
    %144 = vmatprep.subr.bf16.mxu0 0
    %145 = vmatpush1.bf16.msra.mxu0 %v120
    %146 = vmatprep.subr.bf16.mxu0 0
    %147 = vmatpush1.bf16.msra.mxu0 %v119
    %148 = vmatprep.subr.bf16.mxu0 0
    %149 = vmatpush1.bf16.msra.mxu0 %v118
    %150 = vmatprep.subr.bf16.mxu0 0
    %151 = vmatpush2.bf16.msra.mxu0 0
    %152 = vmatprep.subr.bf16.mxu0 0
    %153 = vmatpush2.bf16.msra.mxu0 0
    %154 = vmatprep.subr.bf16.mxu0 0
    %155 = vmatpush2.bf16.msra.mxu0 0
    %156 = vmatprep.subr.bf16.mxu0 0
    %157 = vmatpush2.bf16.msra.mxu0 0
    %158 = vmatprep.subr.bf16.mxu0 0
    %159 = vmatpush2.bf16.msra.mxu0 0
    %160 = vmatprep.subr.bf16.mxu0 0
    %161 = vmatpush2.bf16.msra.mxu0 0
    %162 = vmatprep.subr.bf16.mxu0 0
    %163 = vmatpush2.bf16.msra.mxu0 0
    %164 = vmatprep.subr.bf16.mxu0 0
    %165 = vmatpush2.bf16.msra.mxu0 0
    %166 = vmatprep.mubr.bf16.mxu0 0
    %167 = vmatmul.mubr.bf16.gmra.mxu0 %v62
    %v168 = vpop.f32.mrf.mxu0
    %v169 = vadd.f32 %v84, %v168
    %v170 = vpop.f32.mrf.mxu0
    %v171 = vpop.f32.mrf.mxu0
    %v172 = vpop.f32.mrf.mxu0
    %173 = vdwg.mxu0
    %vm174 = vcmp.ge.f32.partialorder %v169, 0.0
    %v175 = vmul.f32 %v169, 0.2
    %v176 = vsel %vm174, %v169, %v175
    %v177 = vpack.c.bf16 %v176, %v176
    %v178 = vld [vmem:[#allocation7] sm:$0xf]
    %v179 = vld [vmem:[#allocation7 + $0x4] sm:$0xf]
    %v180 = vld [vmem:[#allocation7 + $0x8] sm:$0xf]
    %v181 = vld [vmem:[#allocation7 + $0xc] sm:$0xf]
    %v182 = vld [vmem:[#allocation7 + $0x10] sm:$0xf]
    %v183 = vld [vmem:[#allocation7 + $0x14] sm:$0xf]
    %v184 = vld [vmem:[#allocation7 + $0x18] sm:$0xf]
    %v185 = vld [vmem:[#allocation7 + $0x1c] sm:$0xf]
    %v186 = vld [vmem:[#allocation7 + $0x20] sm:$0xf]
    %v187 = vld [vmem:[#allocation7 + $0x24] sm:$0xf]
    %v188 = vld [vmem:[#allocation7 + $0x28] sm:$0xf]
    %v189 = vld [vmem:[#allocation7 + $0x2c] sm:$0xf]
    %v190 = vld [vmem:[#allocation7 + $0x30] sm:$0xf]
    %v191 = vld [vmem:[#allocation7 + $0x34] sm:$0xf]
    %v192 = vld [vmem:[#allocation7 + $0x38] sm:$0xf]
    %v193 = vld [vmem:[#allocation7 + $0x3c] sm:$0xf]
    %v194 = vld [vmem:[%s4] sm:$0x1]
    %v196 = vlaneseq
    %v197 = vshrl.u32 %v196, 7
    %v198 = vsub.s32 0, %v197
    %v199 = vrot.slane %v194, %v198
    %v217 = vunpack.c.l.b16 %v178
    %v218 = vunpack.c.l.b16 %v179
    %v219 = vunpack.c.l.b16 %v180
    %v220 = vunpack.c.l.b16 %v181
    %v221 = vunpack.c.l.b16 %v182
    %v222 = vunpack.c.l.b16 %v183
    %v223 = vunpack.c.l.b16 %v184
    %v224 = vunpack.c.l.b16 %v185
    %v225 = vunpack.c.l.b16 %v186
    %v226 = vunpack.c.l.b16 %v187
    %v227 = vunpack.c.l.b16 %v188
    %v228 = vunpack.c.l.b16 %v189
    %v229 = vunpack.c.l.b16 %v190
    %v230 = vunpack.c.l.b16 %v191
    %v231 = vunpack.c.l.b16 %v192
    %v232 = vunpack.c.l.b16 %v193
    %v233 = vpack.c.b16 %v218, %v217
    %v234 = vpack.c.b16 %v220, %v219
    %v235 = vpack.c.b16 %v222, %v221
    %v236 = vpack.c.b16 %v224, %v223
    %v237 = vpack.c.b16 %v226, %v225
    %v238 = vpack.c.b16 %v228, %v227
    %v239 = vpack.c.b16 %v230, %v229
    %v240 = vpack.c.b16 %v232, %v231
    %249 = vmatprep.subr.bf16.mxu0 0
    %250 = vmatpush1.bf16.msra.mxu0 %v240
    %251 = vmatprep.subr.bf16.mxu0 0
    %252 = vmatpush1.bf16.msra.mxu0 %v239
    %253 = vmatprep.subr.bf16.mxu0 0
    %254 = vmatpush1.bf16.msra.mxu0 %v238
    %255 = vmatprep.subr.bf16.mxu0 0
    %256 = vmatpush1.bf16.msra.mxu0 %v237
    %257 = vmatprep.subr.bf16.mxu0 0
    %258 = vmatpush1.bf16.msra.mxu0 %v236
    %259 = vmatprep.subr.bf16.mxu0 0
    %260 = vmatpush1.bf16.msra.mxu0 %v235
    %261 = vmatprep.subr.bf16.mxu0 0
    %262 = vmatpush1.bf16.msra.mxu0 %v234
    %263 = vmatprep.subr.bf16.mxu0 0
    %264 = vmatpush1.bf16.msra.mxu0 %v233
    %265 = vmatprep.subr.bf16.mxu0 0
    %266 = vmatpush2.bf16.msra.mxu0 0
    %267 = vmatprep.subr.bf16.mxu0 0
    %268 = vmatpush2.bf16.msra.mxu0 0
    %269 = vmatprep.subr.bf16.mxu0 0
    %270 = vmatpush2.bf16.msra.mxu0 0
    %271 = vmatprep.subr.bf16.mxu0 0
    %272 = vmatpush2.bf16.msra.mxu0 0
    %273 = vmatprep.subr.bf16.mxu0 0
    %274 = vmatpush2.bf16.msra.mxu0 0
    %275 = vmatprep.subr.bf16.mxu0 0
    %276 = vmatpush2.bf16.msra.mxu0 0
    %277 = vmatprep.subr.bf16.mxu0 0
    %278 = vmatpush2.bf16.msra.mxu0 0
    %279 = vmatprep.subr.bf16.mxu0 0
    %280 = vmatpush2.bf16.msra.mxu0 0
    %281 = vmatprep.mubr.bf16.mxu0 0
    %282 = vmatmul.mubr.bf16.gmra.mxu0 %v177
    %v283 = vpop.f32.mrf.mxu0
    %v284 = vadd.f32 %v199, %v283
    %v285 = vpop.f32.mrf.mxu0
    %v286 = vpop.f32.mrf.mxu0
    %v287 = vpop.f32.mrf.mxu0
    %288 = vdwg.mxu0
    %289 = vst [vmem:[#allocation8] sm:$0xff] %v284
    // Predicated region
    $region34: #{tpu_custom_call.1} parent=1 // pred_check
      _
    $region35: #{tpu_custom_call.1} parent=1 // pred_check_branch
      %291 = sbr.rel (0) target = $region37
    $region36: #{tpu_custom_call.1} parent=1 // pred_region
      %s293 = ssub.s32 128, 128
      %294 = vsyncadd [#allocation4], %s293
      %s296 = sshll.u32 [#allocation8], 4
      %s297 = int_to_ptr.vmem [resolvable:$true] %s296
      %299 = dma.vmem_to_hbm [thread:$0]  %s297, 128, %s5, [#allocation4]
    $region37: #{tpu_custom_call.1} parent=1 // pred_fallthru
      _
    // Predicated region
    $region38: #{tpu_custom_call.1} parent=1 // pred_check
      _
    $region39: #{tpu_custom_call.1} parent=1 // pred_check_branch
      %301 = sbr.rel (0) target = $region41
    $region40: #{tpu_custom_call.1} parent=1 // pred_region
      %302 = dma.done [#allocation4], 128
    $region41: #{tpu_custom_call.1} parent=1 // pred_fallthru
      _
    %303 = vsyncpa [#allocation3], 1
    %304 = vsyncpa [#allocation6], 1
    %305 = vsyncpa [#allocation4], 1

</llo_original>
